<compile_context>
chip_gen: v5e
topology: v5e:2x2
jax: 0.10.0
libtpu: 0.0.40
codegen_flags: <defaults>
</compile_context>

<pallas_src>
import jax
import jax.numpy as jnp
from jax.experimental import pallas as pl
from jax.experimental.pallas import tpu as pltpu


# ----------------------------- Pallas kernel --------------------------------

def _composition_kernel(x_ref, t_ref, w1_ref, w2_ref, b2_ref, o_ref):
    """Fused composed score for one (sample-block, pixel-tile).

    Channel-major layout, pixels on the lane axis.  With C ~ 4 both "matmuls"
    are MXU-degenerate, so everything runs as VPU broadcast multiply-adds over
    (Bn, MHD, TP) tiles plus an XLU sublane reduction for the second layer.

    x_ref  : (Bn, C, TP)   pixel tile of Bn samples (native dtype)
    t_ref  : (Bn, MHD, 1)  per-sample fused timestep projection (includes b1)
    w1_ref : (C, MHD, 1)   fused first-layer weights (all models stacked)
    w2_ref : (C, MHD, 1)   fused second-layer weights, pre-scaled by weight_m
    b2_ref : (C, 1)        fused second-layer bias, pre-scaled & summed over m
    o_ref  : (Bn, C, TP)   composed score tile (native dtype)
    """
    x = x_ref[...].astype(jnp.float32)            # (Bn, C, TP), f32 compute
    w1 = w1_ref[...]                              # (C, MHD, 1)
    w2 = w2_ref[...]                              # (C, MHD, 1)
    bn, cc, tp = x.shape

    # Layer 1 (VPU): h = relu(sum_c W1[:, c] * x[c, :] + t_proj)
    acc = w1[0:1] * x[:, 0:1, :]                  # (Bn, MHD, TP)
    for c in range(1, cc):
        acc = acc + w1[c:c + 1] * x[:, c:c + 1, :]
    h = jnp.maximum(acc + t_ref[...], 0.0)        # t broadcasts along lanes

    # Layer 2 (VPU mul + XLU sublane reduce): out[c] = sum_j W2[c, j] * h[j]
    cols = []
    for c in range(cc):
        cols.append(jnp.sum(h * w2[c:c + 1], axis=1, keepdims=True))  # (Bn,1,TP)
    out = jnp.concatenate(cols, axis=1) + b2_ref[...][None, :, :]     # (Bn,C,TP)
    o_ref[...] = out.astype(o_ref.dtype)


# ------------------------------ tiling logic ---------------------------------

def _round_up(x, m):
    return ((x + m - 1) // m) * m


def _divisors_desc(n):
    return [d for d in range(n, 0, -1) if n % d == 0]


def _choose_tiling(N, HW, MHD, elt_bytes,
                   vmem_budget_bytes=24 << 20, target_px_per_step=8192):
    """Pick (samples-per-block Bn, pixel-tile TP, padded H*W) from VMEM budget.

    Per (sample-in-block, pixel) VMEM working set ~ 3 f32 (MHD,) temporaries
    (h and layer-2 products) plus double-buffered, 8-sublane-padded in/out
    tiles.  The 24 MiB budget is safe on v5e (16 MiB scoped default is raised
    via vmem_limit_bytes), v6e (128 MiB physical) and v7x (64 MiB physical).
    """
    per_px = 3 * MHD * 4 + 2 * 2 * 8 * elt_bytes
    max_px = max(128, (vmem_budget_bytes // per_px) // 128 * 128)

    hw_pad0 = _round_up(HW, 128)
    if hw_pad0 <= max_px:
        tp, hw_pad = hw_pad0, hw_pad0
    else:
        tp = max(128, min(max_px, 1 << 16) // 128 * 128)
        hw_pad = _round_up(HW, tp)        # pad so the tile always divides

    # Pack samples per step when one pixel row is small, so each step does far
    # more than the ~0.35 us fixed per-step overhead of work.
    bn = 1
    if tp < target_px_per_step:
        want = max(1, min(max_px // tp, target_px_per_step // tp))
        for d in _divisors_desc(N):
            if d <= want:
                bn = d
                break

    # Keep >= 2 grid steps so both v7x TensorCores get work.
    def steps(bn_, tp_):
        return (N // bn_) * (hw_pad // tp_)

    while steps(bn, tp) < 2:
        if bn > 1:
            smaller = [d for d in _divisors_desc(N) if d < bn]
            bn = smaller[0] if smaller else 1
        elif tp >= 256:
            tp //= 2
        else:
            break
    return bn, tp, hw_pad


# ------------------------------ pallas_call wrapper --------------------------

def composition_pallas(x_flat, t_proj, w1_b, w2_b, b2_col, *, bn, tp):
    """x_flat: (N, C, HWp) native dtype, t_proj: (N, MHD, 1) f32."""
    N, C, HWp = x_flat.shape
    MHD = w1_b.shape[1]
    assert N % bn == 0 and HWp % tp == 0
    grid = (N // bn, HWp // tp)
    elt = jnp.dtype(x_flat.dtype).itemsize

    cost = pl.CostEstimate(
        flops=4 * C * MHD * N * HWp,
        transcendentals=0,
        bytes_accessed=2 * N * C * HWp * elt + N * MHD * 4 + 2 * C * MHD * 4)

    return pl.pallas_call(
        _composition_kernel,
        out_shape=jax.ShapeDtypeStruct((N, C, HWp), x_flat.dtype),
        grid_spec=pltpu.PrefetchScalarGridSpec(
            num_scalar_prefetch=0,
            grid=grid,
            in_specs=[
                pl.BlockSpec((bn, C, tp), lambda b, j: (b, 0, j)),
                pl.BlockSpec((bn, MHD, 1), lambda b, j: (b, 0, 0)),
                pl.BlockSpec((C, MHD, 1), lambda b, j: (0, 0, 0)),
                pl.BlockSpec((C, MHD, 1), lambda b, j: (0, 0, 0)),
                pl.BlockSpec((C, 1), lambda b, j: (0, 0)),
            ],
            out_specs=pl.BlockSpec((bn, C, tp), lambda b, j: (b, 0, j)),
        ),
        compiler_params=pltpu.CompilerParams(
            dimension_semantics=("parallel", "parallel"),
            vmem_limit_bytes=48 * 1024 * 1024),
        cost_estimate=cost,
    )(x_flat, t_proj, w1_b, w2_b, b2_col)


# ------------------------------ JAX glue -------------------------------------

def time_embedding(ts, dim):
    """Sinusoidal timestep embedding, ts: (N,) -> (N, dim)."""
    half = dim // 2
    freqs = jnp.exp(-jnp.log(10000.0) * jnp.arange(half) / half)
    ang = ts[:, None].astype(jnp.float32) * freqs[None, :]
    return jnp.concatenate([jnp.sin(ang), jnp.cos(ang)], axis=-1)


def composition_forward(X_nchw, ts, weights, params):
    """Mirrors Composition.forward: returns the composed score, same NCHW shape.

    # TODO(synk): arbitrary nn.Module sub-models cannot be expressed generically;
    # they are represented here as per-pixel conditional score MLPs and fused
    # algebraically into a single two-layer MLP before the kernel.
    """
    N, C, H, W = X_nchw.shape
    w1, wt, b1, w2, b2 = params          # (M,C,HD) (M,TE,HD) (M,HD) (M,HD,C) (M,C)
    M, _, HD = w1.shape
    TE = wt.shape[1]
    MHD = M * HD
    HW = H * W

    # ---- algebraic fusion of the M models into one two-layer MLP ----------
    # layer 1 (stacked over m): h = relu(sum_c W1[:, c] * x[c] + t_proj)
    w1_b = jnp.transpose(w1, (1, 0, 2)).reshape(C, MHD, 1).astype(jnp.float32)
    wt_cat = jnp.transpose(wt, (1, 0, 2)).reshape(TE, MHD).astype(jnp.float32)
    b1_cat = b1.reshape(MHD).astype(jnp.float32)
    # layer 2: fold the composition weights into W2 / b2
    w2s = w2 * weights[:, None, None]
    w2_b = jnp.transpose(w2s, (2, 0, 1)).reshape(C, MHD, 1).astype(jnp.float32)
    b2_col = (b2 * weights[:, None]).sum(0).reshape(C, 1).astype(jnp.float32)

    # per-sample timestep projection (identical for every pixel of a sample)
    temb = time_embedding(ts, TE)                                  # (N, TE)
    t_proj = (temb @ wt_cat + b1_cat).reshape(N, MHD, 1).astype(jnp.float32)

    # NCHW kept as-is and in its native dtype: (N, C, H*W), pixels on lanes.
    x_flat = X_nchw.reshape(N, C, HW)
    elt = jnp.dtype(X_nchw.dtype).itemsize
    bn, tp, hw_pad = _choose_tiling(N, HW, MHD, elt)
    if hw_pad != HW:
        x_flat = jnp.pad(x_flat, ((0, 0), (0, 0), (0, hw_pad - HW)))

    out = composition_pallas(x_flat, t_proj, w1_b, w2_b, b2_col, bn=bn, tp=tp)
    if hw_pad != HW:
        out = out[:, :, :HW]
    return out.reshape(N, C, H, W)


def composition_reference(X_nchw, ts, weights, params):
    """Pure-JAX reference mimicking the PyTorch per-model loop exactly."""
    N, C, H, W = X_nchw.shape
    w1, wt, b1, w2, b2 = params
    M = w1.shape[0]
    TE = wt.shape[1]

    x_rows = jnp.transpose(X_nchw, (0, 2, 3, 1)).reshape(N * H * W, C)
    temb = time_embedding(ts, TE)
    t_rows = jnp.broadcast_to(temb[:, None, None, :], (N, H, W, TE))
    t_rows = t_rows.reshape(N * H * W, TE)

    score = jnp.zeros_like(x_rows, dtype=jnp.float32)
    for m in range(M):   # torch: for model, weight in zip(models, weights)
        h = jnp.maximum(x_rows @ w1[m] + t_rows @ wt[m] + b1[m], 0.0)
        out = h @ w2[m] + b2[m]
        score = score + out * weights[m]
    return jnp.transpose(score.reshape(N, H, W, C), (0, 3, 1, 2)).astype(X_nchw.dtype)


# --------------------------------- main --------------------------------------

if __name__ == "__main__":
    # small shapes consistent with the forward: X NCHW, ts per-sample, M models
    N, C, H, W = 2, 4, 16, 16
    HD = 32      # hidden width of each model's per-pixel MLP
    TE = 16      # timestep-embedding dim
    M = 3        # number of composed models

    key = jax.random.PRNGKey(0)
    kx, kt, k1, k2, k3, k4, k5 = jax.random.split(key, 7)

    X = jax.random.normal(kx, (N, C, H, W), dtype=jnp.float32)
    ts = jax.random.uniform(kt, (N,), dtype=jnp.float32) * 10.0
    weights = jnp.array([0.5, 0.3, 0.2], dtype=jnp.float32)

    # deterministic parameter init (stacked over the M models)
    params = (
        jax.random.normal(k1, (M, C, HD), dtype=jnp.float32) * 0.2,   # W1
        jax.random.normal(k2, (M, TE, HD), dtype=jnp.float32) * 0.2,  # Wt
        jax.random.normal(k3, (M, HD), dtype=jnp.float32) * 0.1,      # b1
        jax.random.normal(k4, (M, HD, C), dtype=jnp.float32) * 0.2,   # W2
        jax.random.normal(k5, (M, C), dtype=jnp.float32) * 0.1,       # b2
    )

    out = composition_forward(X, ts, weights, params)
    out = jax.block_until_ready(out)

    ref = composition_reference(X, ts, weights, params)
    assert out.shape == X.shape and out.dtype == X.dtype
    assert jnp.allclose(out, ref, atol=1e-4, rtol=1e-4), "mismatch vs reference"

    print("KERNEL_OK")
</pallas_src>

<mosaic_0001>
module attributes {stable_mosaic.version = 11 : i64} {
  func.func @_composition_kernel(%arg0: i32, %arg1: i32, %arg2: memref<1x4x256xf32, #tpu.memory_space<vmem>>, %arg3: memref<1x96x1xf32, #tpu.memory_space<vmem>>, %arg4: memref<4x96x1xf32, #tpu.memory_space<vmem>>, %arg5: memref<4x96x1xf32, #tpu.memory_space<vmem>>, %arg6: memref<4x1xf32, #tpu.memory_space<vmem>>, %arg7: memref<1x4x256xf32, #tpu.memory_space<vmem>>) attributes {dimension_semantics = [#tpu.dimension_semantics<parallel>, #tpu.dimension_semantics<parallel>], iteration_bounds = array<i64: 2, 1>, scalar_prefetch = 0 : i64, scratch_operands = 0 : i64, tpu.core_type = #tpu.core_type<tc>, window_params = [{transform_indices = @transform_0, window_bounds = array<i64: 1, 4, 256>}, {transform_indices = @transform_1, window_bounds = array<i64: 1, 96, 1>}, {pipeline_mode = #tpu.pipeline_mode<synchronous>, transform_indices = @transform_2, window_bounds = array<i64: 4, 96, 1>}, {pipeline_mode = #tpu.pipeline_mode<synchronous>, transform_indices = @transform_3, window_bounds = array<i64: 4, 96, 1>}, {pipeline_mode = #tpu.pipeline_mode<synchronous>, transform_indices = @transform_4, window_bounds = array<i64: 4, 1>}, {transform_indices = @transform_5, window_bounds = array<i64: 1, 4, 256>}]} {
    %c0 = arith.constant 0 : index
    %c0_0 = arith.constant 0 : index
    %c0_1 = arith.constant 0 : index
    %0 = vector.load %arg2[%c0, %c0_0, %c0_1] : memref<1x4x256xf32, #tpu.memory_space<vmem>>, vector<1x4x256xf32>
    %c0_2 = arith.constant 0 : index
    %c0_3 = arith.constant 0 : index
    %c0_4 = arith.constant 0 : index
    %1 = vector.load %arg4[%c0_2, %c0_3, %c0_4] : memref<4x96x1xf32, #tpu.memory_space<vmem>>, vector<4x96x1xf32>
    %c0_5 = arith.constant 0 : index
    %c0_6 = arith.constant 0 : index
    %c0_7 = arith.constant 0 : index
    %2 = vector.load %arg5[%c0_5, %c0_6, %c0_7] : memref<4x96x1xf32, #tpu.memory_space<vmem>>, vector<4x96x1xf32>
    %3 = vector.extract_strided_slice %1 {offsets = [0, 0, 0], sizes = [1, 96, 1], strides = [1, 1, 1]} : vector<4x96x1xf32> to vector<1x96x1xf32>
    %4 = vector.extract_strided_slice %0 {offsets = [0, 0, 0], sizes = [1, 1, 256], strides = [1, 1, 1]} : vector<1x4x256xf32> to vector<1x1x256xf32>
    %5 = vector.broadcast %3 : vector<1x96x1xf32> to vector<1x96x256xf32>
    %6 = vector.broadcast %4 : vector<1x1x256xf32> to vector<1x96x256xf32>
    %7 = arith.mulf %5, %6 : vector<1x96x256xf32>
    %8 = vector.extract_strided_slice %1 {offsets = [1, 0, 0], sizes = [1, 96, 1], strides = [1, 1, 1]} : vector<4x96x1xf32> to vector<1x96x1xf32>
    %9 = vector.extract_strided_slice %0 {offsets = [0, 1, 0], sizes = [1, 1, 256], strides = [1, 1, 1]} : vector<1x4x256xf32> to vector<1x1x256xf32>
    %10 = vector.broadcast %8 : vector<1x96x1xf32> to vector<1x96x256xf32>
    %11 = vector.broadcast %9 : vector<1x1x256xf32> to vector<1x96x256xf32>
    %12 = arith.mulf %10, %11 : vector<1x96x256xf32>
    %13 = arith.addf %7, %12 : vector<1x96x256xf32>
    %14 = vector.extract_strided_slice %1 {offsets = [2, 0, 0], sizes = [1, 96, 1], strides = [1, 1, 1]} : vector<4x96x1xf32> to vector<1x96x1xf32>
    %15 = vector.extract_strided_slice %0 {offsets = [0, 2, 0], sizes = [1, 1, 256], strides = [1, 1, 1]} : vector<1x4x256xf32> to vector<1x1x256xf32>
    %16 = vector.broadcast %14 : vector<1x96x1xf32> to vector<1x96x256xf32>
    %17 = vector.broadcast %15 : vector<1x1x256xf32> to vector<1x96x256xf32>
    %18 = arith.mulf %16, %17 : vector<1x96x256xf32>
    %19 = arith.addf %13, %18 : vector<1x96x256xf32>
    %20 = vector.extract_strided_slice %1 {offsets = [3, 0, 0], sizes = [1, 96, 1], strides = [1, 1, 1]} : vector<4x96x1xf32> to vector<1x96x1xf32>
    %21 = vector.extract_strided_slice %0 {offsets = [0, 3, 0], sizes = [1, 1, 256], strides = [1, 1, 1]} : vector<1x4x256xf32> to vector<1x1x256xf32>
    %22 = vector.broadcast %20 : vector<1x96x1xf32> to vector<1x96x256xf32>
    %23 = vector.broadcast %21 : vector<1x1x256xf32> to vector<1x96x256xf32>
    %24 = arith.mulf %22, %23 : vector<1x96x256xf32>
    %25 = arith.addf %19, %24 : vector<1x96x256xf32>
    %c0_8 = arith.constant 0 : index
    %c0_9 = arith.constant 0 : index
    %c0_10 = arith.constant 0 : index
    %26 = vector.load %arg3[%c0_8, %c0_9, %c0_10] : memref<1x96x1xf32, #tpu.memory_space<vmem>>, vector<1x96x1xf32>
    %27 = vector.broadcast %26 : vector<1x96x1xf32> to vector<1x96x256xf32>
    %28 = arith.addf %25, %27 : vector<1x96x256xf32>
    %cst = arith.constant 0.000000e+00 : f32
    %29 = vector.broadcast %cst : f32 to vector<1x96x256xf32>
    %30 = arith.maximumf %28, %29 : vector<1x96x256xf32>
    %31 = vector.extract_strided_slice %2 {offsets = [0, 0, 0], sizes = [1, 96, 1], strides = [1, 1, 1]} : vector<4x96x1xf32> to vector<1x96x1xf32>
    %32 = vector.broadcast %31 : vector<1x96x1xf32> to vector<1x96x256xf32>
    %33 = arith.mulf %30, %32 : vector<1x96x256xf32>
    %cst_11 = arith.constant dense<0.000000e+00> : vector<1x256xf32>
    %34 = vector.multi_reduction <add>, %33, %cst_11 [1] : vector<1x96x256xf32> to vector<1x256xf32>
    %35 = vector.shape_cast %34 : vector<1x256xf32> to vector<1x1x256xf32>
    %36 = vector.extract_strided_slice %2 {offsets = [1, 0, 0], sizes = [1, 96, 1], strides = [1, 1, 1]} : vector<4x96x1xf32> to vector<1x96x1xf32>
    %37 = vector.broadcast %36 : vector<1x96x1xf32> to vector<1x96x256xf32>
    %38 = arith.mulf %30, %37 : vector<1x96x256xf32>
    %cst_12 = arith.constant dense<0.000000e+00> : vector<1x256xf32>
    %39 = vector.multi_reduction <add>, %38, %cst_12 [1] : vector<1x96x256xf32> to vector<1x256xf32>
    %40 = vector.shape_cast %39 : vector<1x256xf32> to vector<1x1x256xf32>
    %41 = vector.extract_strided_slice %2 {offsets = [2, 0, 0], sizes = [1, 96, 1], strides = [1, 1, 1]} : vector<4x96x1xf32> to vector<1x96x1xf32>
    %42 = vector.broadcast %41 : vector<1x96x1xf32> to vector<1x96x256xf32>
    %43 = arith.mulf %30, %42 : vector<1x96x256xf32>
    %cst_13 = arith.constant dense<0.000000e+00> : vector<1x256xf32>
    %44 = vector.multi_reduction <add>, %43, %cst_13 [1] : vector<1x96x256xf32> to vector<1x256xf32>
    %45 = vector.shape_cast %44 : vector<1x256xf32> to vector<1x1x256xf32>
    %46 = vector.extract_strided_slice %2 {offsets = [3, 0, 0], sizes = [1, 96, 1], strides = [1, 1, 1]} : vector<4x96x1xf32> to vector<1x96x1xf32>
    %47 = vector.broadcast %46 : vector<1x96x1xf32> to vector<1x96x256xf32>
    %48 = arith.mulf %30, %47 : vector<1x96x256xf32>
    %cst_14 = arith.constant dense<0.000000e+00> : vector<1x256xf32>
    %49 = vector.multi_reduction <add>, %48, %cst_14 [1] : vector<1x96x256xf32> to vector<1x256xf32>
    %50 = vector.shape_cast %49 : vector<1x256xf32> to vector<1x1x256xf32>
    %51 = tpu.concatenate %35, %40, %45, %50 in 1 : vector<1x1x256xf32>, vector<1x1x256xf32>, vector<1x1x256xf32>, vector<1x1x256xf32> -> vector<1x4x256xf32>
    %c0_15 = arith.constant 0 : index
    %c0_16 = arith.constant 0 : index
    %52 = vector.load %arg6[%c0_15, %c0_16] : memref<4x1xf32, #tpu.memory_space<vmem>>, vector<4x1xf32>
    %53 = vector.shape_cast %52 : vector<4x1xf32> to vector<1x4x1xf32>
    %54 = vector.broadcast %53 : vector<1x4x1xf32> to vector<1x4x256xf32>
    %55 = arith.addf %51, %54 : vector<1x4x256xf32>
    %c0_17 = arith.constant 0 : index
    %c0_18 = arith.constant 0 : index
    %c0_19 = arith.constant 0 : index
    %56 = vector.load %arg7[%c0_17, %c0_18, %c0_19] : memref<1x4x256xf32, #tpu.memory_space<vmem>>, vector<1x4x256xf32>
    tpu.vector_store %arg7[%c0_17, %c0_18, %c0_19], %55 {strides = array<i32>} : memref<1x4x256xf32, #tpu.memory_space<vmem>>, vector<1x4x256xf32>,
    return
  }
  func.func @transform_0(%arg0: i32, %arg1: i32) -> (i32, i32, i32) {
    %c0_i32 = arith.constant 0 : i32
    %c0_i32_0 = arith.constant 0 : i32
    return %arg0, %c0_i32, %arg1 : i32, i32, i32
  }
  func.func @transform_1(%arg0: i32, %arg1: i32) -> (i32, i32, i32) {
    %c0_i32 = arith.constant 0 : i32
    %c0_i32_0 = arith.constant 0 : i32
    %c0_i32_1 = arith.constant 0 : i32
    return %arg0, %c0_i32, %c0_i32_0 : i32, i32, i32
  }
  func.func @transform_2(%arg0: i32, %arg1: i32) -> (i32, i32, i32) {
    %c0_i32 = arith.constant 0 : i32
    %c0_i32_0 = arith.constant 0 : i32
    %c0_i32_1 = arith.constant 0 : i32
    %c0_i32_2 = arith.constant 0 : i32
    return %c0_i32, %c0_i32_0, %c0_i32_1 : i32, i32, i32
  }
  func.func @transform_3(%arg0: i32, %arg1: i32) -> (i32, i32, i32) {
    %c0_i32 = arith.constant 0 : i32
    %c0_i32_0 = arith.constant 0 : i32
    %c0_i32_1 = arith.constant 0 : i32
    %c0_i32_2 = arith.constant 0 : i32
    return %c0_i32, %c0_i32_0, %c0_i32_1 : i32, i32, i32
  }
  func.func @transform_4(%arg0: i32, %arg1: i32) -> (i32, i32) {
    %c0_i32 = arith.constant 0 : i32
    %c0_i32_0 = arith.constant 0 : i32
    %c0_i32_1 = arith.constant 0 : i32
    return %c0_i32, %c0_i32_0 : i32, i32
  }
  func.func @transform_5(%arg0: i32, %arg1: i32) -> (i32, i32, i32) {
    %c0_i32 = arith.constant 0 : i32
    %c0_i32_0 = arith.constant 0 : i32
    return %arg0, %c0_i32, %arg1 : i32, i32, i32
  }
}

</mosaic_0001>

<llo_original>
// kernel: tpu_custom_call.1
$region0: #{tpu_custom_call.1}
  #allocation0 [shape = 'u32[]', space=smem, size = 0x4, offset = 0x4, fixed_abs, tag = 'smem constant byte address 0x4 - core index']
  #allocation1 [shape = 'u32[72,128]{1,0:T(1,128)}', space=vmem, size = 0x9000, scoped, tag = 'internal scratch']
  %s0 = inlined_call_operand.vmem [shape: f32[2,4,256], index: 0, kind: input, shape index: {}]
  %s1 = inlined_call_operand.vmem [shape: f32[2,96,1], index: 1, kind: input, shape index: {}]
  %s2 = inlined_call_operand.vmem [shape: f32[4,96,1], index: 2, kind: input, shape index: {}]
  %s3 = inlined_call_operand.vmem [shape: f32[4,96,1], index: 3, kind: input, shape index: {}]
  %s4 = inlined_call_operand.vmem [shape: f32[4,1], index: 4, kind: input, shape index: {}]
  %s5 = inlined_call_operand.hbm [shape: f32[2,4,256], index: 5, kind: output, shape index: {}]
  %s6 = sld [smem:[#allocation0]]
  $region53: #{tpu_custom_call.1} parent=0
    _
  %s8 = ssub.s32 1, %s6
  %s9 = scalar_select 0, %s8, %s6
  $region1: #{tpu_custom_call.1} parent=0
    #allocation2 [shape = 'u8[8192]{0}', space=vmem, size = 0x2000, scoped, tag = 'output window, operand 0']
    #allocation3 [shape = 's32[2]{0}', space=sflag, size = 0x8, scoped, tag = 'scoped memory for tpu_custom_call.1']
    %10 = vsyncpa [#allocation3], 0
    %s11 = scalar_lea.sflag [#allocation3], 1
    %12 = vsyncpa %s11, 0
    loop: start=0, step=1, limit=4
    $region2: #{tpu_custom_call.1} parent=1 // loop_pre_header
      _
    $region3: #{tpu_custom_call.1} parent=1 // loop_header
      %s14 = sphi 0, %s18
      %p15 = scmp.ge.s32.totalorder %s14, 4
      %s21 = sphi 0, %s33
      %s22 = sphi 0, %s29
      %s23 = sphi 0, %s21
      %s24 = sphi 0, %s22
      %s25 = sphi 0, %s23
      %s26 = sphi 0, %s24
      %s38 = sphi 0, %s40
      %s41 = sphi 0, %s38
      %s42 = sphi 0, %s41
      %s58 = sphi 0, %s42
      %s64 = sphi 0, %s66
      %s67 = sphi 0, %s64
      %s68 = sphi 0, %s67
      %s84 = sphi 0, %s68
      %s88 = sphi 0, %s88
      %s90 = sphi 0, %s88
      %s91 = sphi 0, %s90
      %s105 = sphi 0, %s91
      %s109 = sphi 0, %s109
      %s111 = sphi 0, %s109
      %s112 = sphi 0, %s111
      %s126 = sphi 0, %s112
      %s130 = sphi 0, %s130
      %s132 = sphi 0, %s130
      %s133 = sphi 0, %s132
      %s147 = sphi 0, %s133
      %s155 = sphi 0, %s157
      %s158 = sphi 0, %s155
      %s159 = sphi 0, %s158
      %s175 = sphi 0, %s159
    $region4: #{tpu_custom_call.1} parent=1 // loop_header_branch
      %17 = sbr.rel (%p15) target = $region8
    $region5: #{tpu_custom_call.1} parent=1 // loop_body
      %s19 = ssub.s32 %s14, 1
      %s20 = ssub.s32 %s14, 2
      %s27 = sadd.s32 1, %s22
      %p28 = scmp.ge.s32.totalorder %s27, 1
      %s29 = scalar_select %p28, 0, %s27
      %s30 = sadd.s32 1, %s21
      %s31 = scalar_select %p28, %s30, %s21
      %p32 = scmp.ge.s32.totalorder %s31, 2
      %s33 = scalar_select %p32, 0, %s31
      %s34 = ssub.s32 %s21, %s33
      %s35 = ssub.s32 %s22, %s29
      %s36 = sor.u32 %s34, %s35
      %p37 = scmp.eq.s32.totalorder %s36, 0
      %s39 = sadd.s32 %s38, 1
      %s40 = scalar_select %p37, %s38, %s39
      %p43 = pneg %p37
      %p44 = scmp.eq.s32.totalorder %s14, 1
      %p45 = por %p43, %p44
      %p46 = scmp.ne.s32.totalorder %s38, %s41
      %p47 = scmp.eq.s32.totalorder %s14, 0
      %p48 = por %p46, %p47
      %p49 = scmp.ne.s32.totalorder %s38, %s41
      %p50 = scmp.eq.s32.totalorder %s19, 1
      %p51 = por %p49, %p50
      %p52 = scmp.ne.s32.totalorder %s41, %s42
      %p53 = scmp.eq.s32.totalorder %s19, 0
      %p54 = por %p52, %p53
      %p55 = scmp.ne.s32.totalorder %s41, %s42
      %p56 = scmp.eq.s32.totalorder %s20, 1
      %p57 = por %p55, %p56
      %p59 = scmp.ne.s32.totalorder %s42, %s58
      %p60 = scmp.eq.s32.totalorder %s20, 0
      %p61 = por %p59, %p60
      %s62 = ssub.s32 %s21, %s33
      %p63 = scmp.eq.s32.totalorder %s62, 0
      %s65 = sadd.s32 %s64, 1
      %s66 = scalar_select %p63, %s64, %s65
      %p69 = pneg %p63
      %p70 = scmp.eq.s32.totalorder %s14, 1
      %p71 = por %p69, %p70
      %p72 = scmp.ne.s32.totalorder %s64, %s67
      %p73 = scmp.eq.s32.totalorder %s14, 0
      %p74 = por %p72, %p73
      %p75 = scmp.ne.s32.totalorder %s64, %s67
      %p76 = scmp.eq.s32.totalorder %s19, 1
      %p77 = por %p75, %p76
      %p78 = scmp.ne.s32.totalorder %s67, %s68
      %p79 = scmp.eq.s32.totalorder %s19, 0
      %p80 = por %p78, %p79
      %p81 = scmp.ne.s32.totalorder %s67, %s68
      %p82 = scmp.eq.s32.totalorder %s20, 1
      %p83 = por %p81, %p82
      %p85 = scmp.ne.s32.totalorder %s68, %s84
      %p86 = scmp.eq.s32.totalorder %s20, 0
      %p87 = por %p85, %p86
      %s89 = sadd.s32 %s88, 1
      %p92 = scmp.eq.s32.totalorder %s14, 1
      %p93 = scmp.ne.s32.totalorder %s88, %s90
      %p94 = scmp.eq.s32.totalorder %s14, 0
      %p95 = por %p93, %p94
      %p96 = scmp.ne.s32.totalorder %s88, %s90
      %p97 = scmp.eq.s32.totalorder %s19, 1
      %p98 = por %p96, %p97
      %p99 = scmp.ne.s32.totalorder %s90, %s91
      %p100 = scmp.eq.s32.totalorder %s19, 0
      %p101 = por %p99, %p100
      %p102 = scmp.ne.s32.totalorder %s90, %s91
      %p103 = scmp.eq.s32.totalorder %s20, 1
      %p104 = por %p102, %p103
      %p106 = scmp.ne.s32.totalorder %s91, %s105
      %p107 = scmp.eq.s32.totalorder %s20, 0
      %p108 = por %p106, %p107
      %s110 = sadd.s32 %s109, 1
      %p113 = scmp.eq.s32.totalorder %s14, 1
      %p114 = scmp.ne.s32.totalorder %s109, %s111
      %p115 = scmp.eq.s32.totalorder %s14, 0
      %p116 = por %p114, %p115
      %p117 = scmp.ne.s32.totalorder %s109, %s111
      %p118 = scmp.eq.s32.totalorder %s19, 1
      %p119 = por %p117, %p118
      %p120 = scmp.ne.s32.totalorder %s111, %s112
      %p121 = scmp.eq.s32.totalorder %s19, 0
      %p122 = por %p120, %p121
      %p123 = scmp.ne.s32.totalorder %s111, %s112
      %p124 = scmp.eq.s32.totalorder %s20, 1
      %p125 = por %p123, %p124
      %p127 = scmp.ne.s32.totalorder %s112, %s126
      %p128 = scmp.eq.s32.totalorder %s20, 0
      %p129 = por %p127, %p128
      %s131 = sadd.s32 %s130, 1
      %p134 = scmp.eq.s32.totalorder %s14, 1
      %p135 = scmp.ne.s32.totalorder %s130, %s132
      %p136 = scmp.eq.s32.totalorder %s14, 0
      %p137 = por %p135, %p136
      %p138 = scmp.ne.s32.totalorder %s130, %s132
      %p139 = scmp.eq.s32.totalorder %s19, 1
      %p140 = por %p138, %p139
      %p141 = scmp.ne.s32.totalorder %s132, %s133
      %p142 = scmp.eq.s32.totalorder %s19, 0
      %p143 = por %p141, %p142
      %p144 = scmp.ne.s32.totalorder %s132, %s133
      %p145 = scmp.eq.s32.totalorder %s20, 1
      %p146 = por %p144, %p145
      %p148 = scmp.ne.s32.totalorder %s133, %s147
      %p149 = scmp.eq.s32.totalorder %s20, 0
      %p150 = por %p148, %p149
      %s151 = ssub.s32 %s21, %s33
      %s152 = ssub.s32 %s22, %s29
      %s153 = sor.u32 %s151, %s152
      %p154 = scmp.eq.s32.totalorder %s153, 0
      %s156 = sadd.s32 %s155, 1
      %s157 = scalar_select %p154, %s155, %s156
      %p160 = pneg %p154
      %p161 = scmp.eq.s32.totalorder %s14, 1
      %p162 = por %p160, %p161
      %p163 = scmp.ne.s32.totalorder %s155, %s158
      %p164 = scmp.eq.s32.totalorder %s14, 0
      %p165 = por %p163, %p164
      %p166 = scmp.ne.s32.totalorder %s155, %s158
      %p167 = scmp.eq.s32.totalorder %s19, 1
      %p168 = por %p166, %p167
      %p169 = scmp.ne.s32.totalorder %s158, %s159
      %p170 = scmp.eq.s32.totalorder %s19, 0
      %p171 = por %p169, %p170
      %p172 = scmp.ne.s32.totalorder %s158, %s159
      %p173 = scmp.eq.s32.totalorder %s20, 1
      %p174 = por %p172, %p173
      %p176 = scmp.ne.s32.totalorder %s159, %s175
      %p177 = scmp.eq.s32.totalorder %s20, 0
      %p178 = por %p176, %p177
      %p179 = scmp.le.s32.totalorder 1, %s14
      %p180 = scmp.lt.s32.totalorder %s14, 3
      %p181 = pnand %p179, %p180
      %p182 = pneg %p181
      // Predicated region
      $region9: #{tpu_custom_call.1} parent=5 // pred_check
        _
      $region10: #{tpu_custom_call.1} parent=5 // pred_check_branch
        %184 = sbr.rel (%p181) target = $region12
      $region11: #{tpu_custom_call.1} parent=5 // pred_region
        %s185 = ssub.s32 %s14, 1
        // Predicated region
        $region13: #{tpu_custom_call.1} parent=11 // pred_check
          %p186 = pneg %p101
        $region14: #{tpu_custom_call.1} parent=11 // pred_check_branch
          %188 = sbr.rel (%p186) target = $region16
        $region15: #{tpu_custom_call.1} parent=11 // pred_region
          _
        $region16: #{tpu_custom_call.1} parent=11 // pred_fallthru
          _
        // Predicated region
        $region17: #{tpu_custom_call.1} parent=11 // pred_check
          %p189 = pneg %p122
        $region18: #{tpu_custom_call.1} parent=11 // pred_check_branch
          %191 = sbr.rel (%p189) target = $region20
        $region19: #{tpu_custom_call.1} parent=11 // pred_region
          _
        $region20: #{tpu_custom_call.1} parent=11 // pred_fallthru
          _
        // Predicated region
        $region21: #{tpu_custom_call.1} parent=11 // pred_check
          %p192 = pneg %p143
        $region22: #{tpu_custom_call.1} parent=11 // pred_check_branch
          %194 = sbr.rel (%p192) target = $region24
        $region23: #{tpu_custom_call.1} parent=11 // pred_region
          _
        $region24: #{tpu_custom_call.1} parent=11 // pred_fallthru
          _
      $region12: #{tpu_custom_call.1} parent=5 // pred_fallthru
        _
      %p195 = scmp.lt.s32.totalorder %s14, 2
      // Predicated region
      $region25: #{tpu_custom_call.1} parent=5 // pred_check
        %p196 = pneg %p195
      $region26: #{tpu_custom_call.1} parent=5 // pred_check_branch
        %198 = sbr.rel (%p196) target = $region28
      $region27: #{tpu_custom_call.1} parent=5 // pred_region
        // Predicated region
        $region29: #{tpu_custom_call.1} parent=27 // pred_check
          %p199 = pneg %p48
        $region30: #{tpu_custom_call.1} parent=27 // pred_check_branch
          %201 = sbr.rel (%p199) target = $region32
        $region31: #{tpu_custom_call.1} parent=27 // pred_region
          %s202 = smul.u32 2, %s22
          %p203 = scmp.lt.s32.totalorder %s21, 1
          %s204 = scalar_select %p203, %s21, 1
          %p205 = scmp.lt.s32.totalorder %s202, 1
          %s206 = scalar_select %p205, %s202, 1
          %s207 = smul.addr %s204, 2
          %s208 = sadd.s32 %s206, %s207
          %s209 = smul.addr %s208, 4
          %s210 = scalar_lea.vmem %s0, %s209
          %s211 = smul.u32 2, %s22
        $region32: #{tpu_custom_call.1} parent=27 // pred_fallthru
          _
        // Predicated region
        $region33: #{tpu_custom_call.1} parent=27 // pred_check
          %p212 = pneg %p74
        $region34: #{tpu_custom_call.1} parent=27 // pred_check_branch
          %214 = sbr.rel (%p212) target = $region36
        $region35: #{tpu_custom_call.1} parent=27 // pred_region
          %p215 = scmp.lt.s32.totalorder %s21, 1
          %s216 = scalar_select %p215, %s21, 1
          %s217 = smul.addr %s216, 12
          %s218 = smul.addr %s217, 8
          %s219 = scalar_lea.vmem %s1, %s218
        $region36: #{tpu_custom_call.1} parent=27 // pred_fallthru
          _
      $region28: #{tpu_custom_call.1} parent=5 // pred_fallthru
        _
      %p220 = scmp.le.s32.totalorder 1, %s14
      %p221 = scmp.lt.s32.totalorder %s14, 3
      %p222 = pnand %p220, %p221
      %p223 = pneg %p222
      // Predicated region
      $region37: #{tpu_custom_call.1} parent=5 // pred_check
        _
      $region38: #{tpu_custom_call.1} parent=5 // pred_check_branch
        %225 = sbr.rel (%p222) target = $region40
      $region39: #{tpu_custom_call.1} parent=5 // pred_region
        %s226 = ssub.s32 %s14, 1
        %s227 = smul.u32 2, %s24
        %p228 = scmp.lt.s32.totalorder %s23, 1
        %s229 = scalar_select %p228, %s23, 1
        %p230 = scmp.lt.s32.totalorder %s227, 1
        %s231 = scalar_select %p230, %s227, 1
        %s232 = smul.addr %s229, 2
        %s233 = sadd.s32 %s231, %s232
        %s234 = smul.addr %s233, 4
        %s235 = scalar_lea.vmem %s0, %s234
        %p236 = pneg %p54
        %p237 = pneg %p51
        %p238 = scmp.lt.s32.totalorder %s23, 1
        %s239 = scalar_select %p238, %s23, 1
        %s240 = smul.addr %s239, 12
        %s241 = smul.addr %s240, 8
        %s242 = scalar_lea.vmem %s1, %s241
        %p243 = pneg %p80
        %p244 = pneg %p77
        %p245 = pneg %p101
        %p246 = pneg %p98
        %p247 = pneg %p122
        %p248 = pneg %p119
        %p249 = pneg %p143
        %p250 = pneg %p140
        %p251 = pneg %p171
        %p252 = pneg %p168
        %s253 = sand.u32 %s158, 1
        %s254 = scalar_lea.sflag [#allocation3], %s253
        %s255 = sand.u32 %s158, 1
        %s256 = smul.addr %s255, 8
        %s257 = scalar_lea.vmem [#allocation2], %s256
        %s258 = smul.u32 2, %s24
        %p259 = scmp.lt.s32.totalorder %s23, 1
        %s260 = scalar_select %p259, %s23, 1
        %p261 = scmp.lt.s32.totalorder %s258, 1
        %s262 = scalar_select %p261, %s258, 1
        %s263 = smul.addr %s260, 2
        %s264 = sadd.s32 %s262, %s263
        %s265 = smul.addr %s264, 4
        %s266 = scalar_lea.vmem %s0, %s265
        %s267 = smul.u32 2, %s24
        %p268 = scmp.lt.s32.totalorder %s23, 1
        %s269 = scalar_select %p268, %s23, 1
        %s270 = smul.addr %s269, 12
        %s271 = smul.addr %s270, 8
        %s272 = scalar_lea.vmem %s1, %s271
        %s273 = smul.u32 2, %s24
        %v274 = vld [vmem:[%s266] sm:$0xff]
        %v275 = vld [vmem:[%s2] sm:$0xff]
        %v276 = vld [vmem:[%s2 + $0x8] sm:$0xff]
        %v277 = vld [vmem:[%s2 + $0x10] sm:$0xff]
        %v278 = vld [vmem:[%s2 + $0x18] sm:$0xff]
        %v279 = vld [vmem:[%s2 + $0x20] sm:$0xff]
        %v280 = vld [vmem:[%s2 + $0x28] sm:$0xff]
        %v281 = vld [vmem:[%s2 + $0x30] sm:$0xff]
        %v282 = vld [vmem:[%s2 + $0x38] sm:$0xff]
        %v283 = vld [vmem:[%s2 + $0x40] sm:$0xff]
        %v284 = vld [vmem:[%s2 + $0x48] sm:$0xff]
        %v285 = vld [vmem:[%s2 + $0x50] sm:$0xff]
        %v286 = vld [vmem:[%s2 + $0x58] sm:$0xff]
        %v287 = vld [vmem:[%s2 + $0x60] sm:$0xff]
        %v288 = vld [vmem:[%s2 + $0x68] sm:$0xff]
        %v289 = vld [vmem:[%s2 + $0x70] sm:$0xff]
        %v290 = vld [vmem:[%s2 + $0x78] sm:$0xff]
        %v291 = vld [vmem:[%s2 + $0x80] sm:$0xff]
        %v292 = vld [vmem:[%s2 + $0x88] sm:$0xff]
        %v293 = vld [vmem:[%s2 + $0x90] sm:$0xff]
        %v294 = vld [vmem:[%s2 + $0x98] sm:$0xff]
        %v295 = vld [vmem:[%s2 + $0xa0] sm:$0xff]
        %v296 = vld [vmem:[%s2 + $0xa8] sm:$0xff]
        %v297 = vld [vmem:[%s2 + $0xb0] sm:$0xff]
        %v298 = vld [vmem:[%s2 + $0xb8] sm:$0xff]
        %v299 = vld [vmem:[%s2 + $0xc0] sm:$0xff]
        %v300 = vld [vmem:[%s2 + $0xc8] sm:$0xff]
        %v301 = vld [vmem:[%s2 + $0xd0] sm:$0xff]
        %v302 = vld [vmem:[%s2 + $0xd8] sm:$0xff]
        %v303 = vld [vmem:[%s2 + $0xe0] sm:$0xff]
        %v304 = vld [vmem:[%s2 + $0xe8] sm:$0xff]
        %v305 = vld [vmem:[%s2 + $0xf0] sm:$0xff]
        %v306 = vld [vmem:[%s2 + $0xf8] sm:$0xff]
        %v307 = vld [vmem:[%s2 + $0x100] sm:$0xff]
        %v308 = vld [vmem:[%s2 + $0x108] sm:$0xff]
        %v309 = vld [vmem:[%s2 + $0x110] sm:$0xff]
        %v310 = vld [vmem:[%s2 + $0x118] sm:$0xff]
        %v311 = vld [vmem:[%s2 + $0x120] sm:$0xff]
        %v312 = vld [vmem:[%s2 + $0x128] sm:$0xff]
        %v313 = vld [vmem:[%s2 + $0x130] sm:$0xff]
        %v314 = vld [vmem:[%s2 + $0x138] sm:$0xff]
        %v315 = vld [vmem:[%s2 + $0x140] sm:$0xff]
        %v316 = vld [vmem:[%s2 + $0x148] sm:$0xff]
        %v317 = vld [vmem:[%s2 + $0x150] sm:$0xff]
        %v318 = vld [vmem:[%s2 + $0x158] sm:$0xff]
        %v319 = vld [vmem:[%s2 + $0x160] sm:$0xff]
        %v320 = vld [vmem:[%s2 + $0x168] sm:$0xff]
        %v321 = vld [vmem:[%s2 + $0x170] sm:$0xff]
        %v322 = vld [vmem:[%s2 + $0x178] sm:$0xff]
        %v323 = vld [vmem:[%s3] sm:$0xff]
        %v324 = vld [vmem:[%s3 + $0x8] sm:$0xff]
        %v325 = vld [vmem:[%s3 + $0x10] sm:$0xff]
        %v326 = vld [vmem:[%s3 + $0x18] sm:$0xff]
        %v327 = vld [vmem:[%s3 + $0x20] sm:$0xff]
        %v328 = vld [vmem:[%s3 + $0x28] sm:$0xff]
        %v329 = vld [vmem:[%s3 + $0x30] sm:$0xff]
        %v330 = vld [vmem:[%s3 + $0x38] sm:$0xff]
        %v331 = vld [vmem:[%s3 + $0x40] sm:$0xff]
        %v332 = vld [vmem:[%s3 + $0x48] sm:$0xff]
        %v333 = vld [vmem:[%s3 + $0x50] sm:$0xff]
        %v334 = vld [vmem:[%s3 + $0x58] sm:$0xff]
        %v335 = vld [vmem:[%s3 + $0x60] sm:$0xff]
        %v336 = vld [vmem:[%s3 + $0x68] sm:$0xff]
        %v337 = vld [vmem:[%s3 + $0x70] sm:$0xff]
        %v338 = vld [vmem:[%s3 + $0x78] sm:$0xff]
        %v339 = vld [vmem:[%s3 + $0x80] sm:$0xff]
        %v340 = vld [vmem:[%s3 + $0x88] sm:$0xff]
        %v341 = vld [vmem:[%s3 + $0x90] sm:$0xff]
        %v342 = vld [vmem:[%s3 + $0x98] sm:$0xff]
        %v343 = vld [vmem:[%s3 + $0xa0] sm:$0xff]
        %v344 = vld [vmem:[%s3 + $0xa8] sm:$0xff]
        %v345 = vld [vmem:[%s3 + $0xb0] sm:$0xff]
        %v346 = vld [vmem:[%s3 + $0xb8] sm:$0xff]
        %v347 = vld [vmem:[%s3 + $0xc0] sm:$0xff]
        %v348 = vld [vmem:[%s3 + $0xc8] sm:$0xff]
        %v349 = vld [vmem:[%s3 + $0xd0] sm:$0xff]
        %v350 = vld [vmem:[%s3 + $0xd8] sm:$0xff]
        %v351 = vld [vmem:[%s3 + $0xe0] sm:$0xff]
        %v352 = vld [vmem:[%s3 + $0xe8] sm:$0xff]
        %v353 = vld [vmem:[%s3 + $0xf0] sm:$0xff]
        %v354 = vld [vmem:[%s3 + $0xf8] sm:$0xff]
        %v355 = vld [vmem:[%s3 + $0x100] sm:$0xff]
        %v356 = vld [vmem:[%s3 + $0x108] sm:$0xff]
        %v357 = vld [vmem:[%s3 + $0x110] sm:$0xff]
        %v358 = vld [vmem:[%s3 + $0x118] sm:$0xff]
        %v359 = vld [vmem:[%s3 + $0x120] sm:$0xff]
        %v360 = vld [vmem:[%s3 + $0x128] sm:$0xff]
        %v361 = vld [vmem:[%s3 + $0x130] sm:$0xff]
        %v362 = vld [vmem:[%s3 + $0x138] sm:$0xff]
        %v363 = vld [vmem:[%s3 + $0x140] sm:$0xff]
        %v364 = vld [vmem:[%s3 + $0x148] sm:$0xff]
        %v365 = vld [vmem:[%s3 + $0x150] sm:$0xff]
        %v366 = vld [vmem:[%s3 + $0x158] sm:$0xff]
        %v367 = vld [vmem:[%s3 + $0x160] sm:$0xff]
        %v368 = vld [vmem:[%s3 + $0x168] sm:$0xff]
        %v369 = vld [vmem:[%s3 + $0x170] sm:$0xff]
        %v370 = vld [vmem:[%s3 + $0x178] sm:$0xff]
        %372 = vset.pattern.permute.xlu0 0
        %373 = vperm.xlu0 %372, %v275
        %v374 = vpop.permute.xlu0 %373
        %377 = vset.pattern.permute.xlu0 0
        %378 = vperm.xlu0 %377, %v276
        %v379 = vpop.permute.xlu0 %378
        %382 = vset.pattern.permute.xlu0 0
        %383 = vperm.xlu0 %382, %v277
        %v384 = vpop.permute.xlu0 %383
        %387 = vset.pattern.permute.xlu0 0
        %388 = vperm.xlu0 %387, %v278
        %v389 = vpop.permute.xlu0 %388
        %392 = vset.pattern.permute.xlu0 0
        %393 = vperm.xlu0 %392, %v279
        %v394 = vpop.permute.xlu0 %393
        %397 = vset.pattern.permute.xlu0 0
        %398 = vperm.xlu0 %397, %v280
        %v399 = vpop.permute.xlu0 %398
        %402 = vset.pattern.permute.xlu0 0
        %403 = vperm.xlu0 %402, %v281
        %v404 = vpop.permute.xlu0 %403
        %407 = vset.pattern.permute.xlu0 0
        %408 = vperm.xlu0 %407, %v282
        %v409 = vpop.permute.xlu0 %408
        %412 = vset.pattern.permute.xlu0 0
        %413 = vperm.xlu0 %412, %v283
        %v414 = vpop.permute.xlu0 %413
        %417 = vset.pattern.permute.xlu0 0
        %418 = vperm.xlu0 %417, %v284
        %v419 = vpop.permute.xlu0 %418
        %422 = vset.pattern.permute.xlu0 0
        %423 = vperm.xlu0 %422, %v285
        %v424 = vpop.permute.xlu0 %423
        %427 = vset.pattern.permute.xlu0 0
        %428 = vperm.xlu0 %427, %v286
        %v429 = vpop.permute.xlu0 %428
        %v432 = vperm.slane %v274, 0
        %v433 = vperm.slane %v274, 4
        %v436 = vperm.slane %v432, 0
        %v437 = vperm.slane %v433, 0
        %v438 = vmul.f32 %v374, %v436
        %v439 = vmul.f32 %v374, %v437
        %v440 = vmul.f32 %v379, %v436
        %v441 = vmul.f32 %v379, %v437
        %v442 = vmul.f32 %v384, %v436
        %v443 = vmul.f32 %v384, %v437
        %v444 = vmul.f32 %v389, %v436
        %v445 = vmul.f32 %v389, %v437
        %v446 = vmul.f32 %v394, %v436
        %v447 = vmul.f32 %v394, %v437
        %v448 = vmul.f32 %v399, %v436
        %v449 = vmul.f32 %v399, %v437
        %v450 = vmul.f32 %v404, %v436
        %v451 = vmul.f32 %v404, %v437
        %v452 = vmul.f32 %v409, %v436
        %v453 = vmul.f32 %v409, %v437
        %v454 = vmul.f32 %v414, %v436
        %v455 = vmul.f32 %v414, %v437
        %v456 = vmul.f32 %v419, %v436
        %v457 = vmul.f32 %v419, %v437
        %v458 = vmul.f32 %v424, %v436
        %v459 = vmul.f32 %v424, %v437
        %v460 = vmul.f32 %v429, %v436
        %v461 = vmul.f32 %v429, %v437
        %463 = vset.pattern.permute.xlu0 0
        %464 = vperm.xlu0 %463, %v287
        %v465 = vpop.permute.xlu0 %464
        %468 = vset.pattern.permute.xlu0 0
        %469 = vperm.xlu0 %468, %v288
        %v470 = vpop.permute.xlu0 %469
        %473 = vset.pattern.permute.xlu0 0
        %474 = vperm.xlu0 %473, %v289
        %v475 = vpop.permute.xlu0 %474
        %478 = vset.pattern.permute.xlu0 0
        %479 = vperm.xlu0 %478, %v290
        %v480 = vpop.permute.xlu0 %479
        %483 = vset.pattern.permute.xlu0 0
        %484 = vperm.xlu0 %483, %v291
        %v485 = vpop.permute.xlu0 %484
        %488 = vset.pattern.permute.xlu0 0
        %489 = vperm.xlu0 %488, %v292
        %v490 = vpop.permute.xlu0 %489
        %493 = vset.pattern.permute.xlu0 0
        %494 = vperm.xlu0 %493, %v293
        %v495 = vpop.permute.xlu0 %494
        %498 = vset.pattern.permute.xlu0 0
        %499 = vperm.xlu0 %498, %v294
        %v500 = vpop.permute.xlu0 %499
        %503 = vset.pattern.permute.xlu0 0
        %504 = vperm.xlu0 %503, %v295
        %v505 = vpop.permute.xlu0 %504
        %508 = vset.pattern.permute.xlu0 0
        %509 = vperm.xlu0 %508, %v296
        %v510 = vpop.permute.xlu0 %509
        %513 = vset.pattern.permute.xlu0 0
        %514 = vperm.xlu0 %513, %v297
        %v515 = vpop.permute.xlu0 %514
        %518 = vset.pattern.permute.xlu0 0
        %519 = vperm.xlu0 %518, %v298
        %v520 = vpop.permute.xlu0 %519
        %v522 = vperm.slane %v274, 1
        %v523 = vperm.slane %v274, 5
        %v526 = vperm.slane %v522, 1
        %v527 = vperm.slane %v523, 1
        %v528 = vmul.f32 %v465, %v526
        %v529 = vmul.f32 %v465, %v527
        %v530 = vmul.f32 %v470, %v526
        %v531 = vmul.f32 %v470, %v527
        %v532 = vmul.f32 %v475, %v526
        %v533 = vmul.f32 %v475, %v527
        %v534 = vmul.f32 %v480, %v526
        %v535 = vmul.f32 %v480, %v527
        %v536 = vmul.f32 %v485, %v526
        %v537 = vmul.f32 %v485, %v527
        %v538 = vmul.f32 %v490, %v526
        %v539 = vmul.f32 %v490, %v527
        %v540 = vmul.f32 %v495, %v526
        %v541 = vmul.f32 %v495, %v527
        %v542 = vmul.f32 %v500, %v526
        %v543 = vmul.f32 %v500, %v527
        %v544 = vmul.f32 %v505, %v526
        %v545 = vmul.f32 %v505, %v527
        %v546 = vmul.f32 %v510, %v526
        %v547 = vmul.f32 %v510, %v527
        %v548 = vmul.f32 %v515, %v526
        %v549 = vmul.f32 %v515, %v527
        %v550 = vmul.f32 %v520, %v526
        %v551 = vmul.f32 %v520, %v527
        %v552 = vadd.f32 %v438, %v528
        %v553 = vadd.f32 %v439, %v529
        %v554 = vadd.f32 %v440, %v530
        %v555 = vadd.f32 %v441, %v531
        %v556 = vadd.f32 %v442, %v532
        %v557 = vadd.f32 %v443, %v533
        %v558 = vadd.f32 %v444, %v534
        %v559 = vadd.f32 %v445, %v535
        %v560 = vadd.f32 %v446, %v536
        %v561 = vadd.f32 %v447, %v537
        %v562 = vadd.f32 %v448, %v538
        %v563 = vadd.f32 %v449, %v539
        %v564 = vadd.f32 %v450, %v540
        %v565 = vadd.f32 %v451, %v541
        %v566 = vadd.f32 %v452, %v542
        %v567 = vadd.f32 %v453, %v543
        %v568 = vadd.f32 %v454, %v544
        %v569 = vadd.f32 %v455, %v545
        %v570 = vadd.f32 %v456, %v546
        %v571 = vadd.f32 %v457, %v547
        %v572 = vadd.f32 %v458, %v548
        %v573 = vadd.f32 %v459, %v549
        %v574 = vadd.f32 %v460, %v550
        %v575 = vadd.f32 %v461, %v551
        %577 = vset.pattern.permute.xlu0 0
        %578 = vperm.xlu0 %577, %v299
        %v579 = vpop.permute.xlu0 %578
        %582 = vset.pattern.permute.xlu0 0
        %583 = vperm.xlu0 %582, %v300
        %v584 = vpop.permute.xlu0 %583
        %587 = vset.pattern.permute.xlu0 0
        %588 = vperm.xlu0 %587, %v301
        %v589 = vpop.permute.xlu0 %588
        %592 = vset.pattern.permute.xlu0 0
        %593 = vperm.xlu0 %592, %v302
        %v594 = vpop.permute.xlu0 %593
        %597 = vset.pattern.permute.xlu0 0
        %598 = vperm.xlu0 %597, %v303
        %v599 = vpop.permute.xlu0 %598
        %602 = vset.pattern.permute.xlu0 0
        %603 = vperm.xlu0 %602, %v304
        %v604 = vpop.permute.xlu0 %603
        %607 = vset.pattern.permute.xlu0 0
        %608 = vperm.xlu0 %607, %v305
        %v609 = vpop.permute.xlu0 %608
        %612 = vset.pattern.permute.xlu0 0
        %613 = vperm.xlu0 %612, %v306
        %v614 = vpop.permute.xlu0 %613
        %617 = vset.pattern.permute.xlu0 0
        %618 = vperm.xlu0 %617, %v307
        %v619 = vpop.permute.xlu0 %618
        %622 = vset.pattern.permute.xlu0 0
        %623 = vperm.xlu0 %622, %v308
        %v624 = vpop.permute.xlu0 %623
        %627 = vset.pattern.permute.xlu0 0
        %628 = vperm.xlu0 %627, %v309
        %v629 = vpop.permute.xlu0 %628
        %632 = vset.pattern.permute.xlu0 0
        %633 = vperm.xlu0 %632, %v310
        %v634 = vpop.permute.xlu0 %633
        %v636 = vperm.slane %v274, 2
        %v637 = vperm.slane %v274, 6
        %v640 = vperm.slane %v636, 2
        %v641 = vperm.slane %v637, 2
        %v642 = vmul.f32 %v579, %v640
        %v643 = vmul.f32 %v579, %v641
        %v644 = vmul.f32 %v584, %v640
        %v645 = vmul.f32 %v584, %v641
        %v646 = vmul.f32 %v589, %v640
        %v647 = vmul.f32 %v589, %v641
        %v648 = vmul.f32 %v594, %v640
        %v649 = vmul.f32 %v594, %v641
        %v650 = vmul.f32 %v599, %v640
        %v651 = vmul.f32 %v599, %v641
        %v652 = vmul.f32 %v604, %v640
        %v653 = vmul.f32 %v604, %v641
        %v654 = vmul.f32 %v609, %v640
        %v655 = vmul.f32 %v609, %v641
        %v656 = vmul.f32 %v614, %v640
        %v657 = vmul.f32 %v614, %v641
        %v658 = vmul.f32 %v619, %v640
        %v659 = vmul.f32 %v619, %v641
        %v660 = vmul.f32 %v624, %v640
        %v661 = vmul.f32 %v624, %v641
        %v662 = vmul.f32 %v629, %v640
        %v663 = vmul.f32 %v629, %v641
        %v664 = vmul.f32 %v634, %v640
        %v665 = vmul.f32 %v634, %v641
        %v666 = vadd.f32 %v552, %v642
        %v667 = vadd.f32 %v553, %v643
        %v668 = vadd.f32 %v554, %v644
        %v669 = vadd.f32 %v555, %v645
        %v670 = vadd.f32 %v556, %v646
        %v671 = vadd.f32 %v557, %v647
        %v672 = vadd.f32 %v558, %v648
        %v673 = vadd.f32 %v559, %v649
        %v674 = vadd.f32 %v560, %v650
        %v675 = vadd.f32 %v561, %v651
        %v676 = vadd.f32 %v562, %v652
        %v677 = vadd.f32 %v563, %v653
        %v678 = vadd.f32 %v564, %v654
        %v679 = vadd.f32 %v565, %v655
        %v680 = vadd.f32 %v566, %v656
        %v681 = vadd.f32 %v567, %v657
        %v682 = vadd.f32 %v568, %v658
        %v683 = vadd.f32 %v569, %v659
        %v684 = vadd.f32 %v570, %v660
        %v685 = vadd.f32 %v571, %v661
        %v686 = vadd.f32 %v572, %v662
        %v687 = vadd.f32 %v573, %v663
        %v688 = vadd.f32 %v574, %v664
        %v689 = vadd.f32 %v575, %v665
        %691 = vset.pattern.permute.xlu0 0
        %692 = vperm.xlu0 %691, %v311
        %v693 = vpop.permute.xlu0 %692
        %696 = vset.pattern.permute.xlu0 0
        %697 = vperm.xlu0 %696, %v312
        %v698 = vpop.permute.xlu0 %697
        %701 = vset.pattern.permute.xlu0 0
        %702 = vperm.xlu0 %701, %v313
        %v703 = vpop.permute.xlu0 %702
        %706 = vset.pattern.permute.xlu0 0
        %707 = vperm.xlu0 %706, %v314
        %v708 = vpop.permute.xlu0 %707
        %711 = vset.pattern.permute.xlu0 0
        %712 = vperm.xlu0 %711, %v315
        %v713 = vpop.permute.xlu0 %712
        %716 = vset.pattern.permute.xlu0 0
        %717 = vperm.xlu0 %716, %v316
        %v718 = vpop.permute.xlu0 %717
        %721 = vset.pattern.permute.xlu0 0
        %722 = vperm.xlu0 %721, %v317
        %v723 = vpop.permute.xlu0 %722
        %726 = vset.pattern.permute.xlu0 0
        %727 = vperm.xlu0 %726, %v318
        %v728 = vpop.permute.xlu0 %727
        %731 = vset.pattern.permute.xlu0 0
        %732 = vperm.xlu0 %731, %v319
        %v733 = vpop.permute.xlu0 %732
        %736 = vset.pattern.permute.xlu0 0
        %737 = vperm.xlu0 %736, %v320
        %v738 = vpop.permute.xlu0 %737
        %741 = vset.pattern.permute.xlu0 0
        %742 = vperm.xlu0 %741, %v321
        %v743 = vpop.permute.xlu0 %742
        %746 = vset.pattern.permute.xlu0 0
        %747 = vperm.xlu0 %746, %v322
        %v748 = vpop.permute.xlu0 %747
        %v750 = vperm.slane %v274, 3
        %v751 = vperm.slane %v274, 7
        %v754 = vperm.slane %v750, 3
        %v755 = vperm.slane %v751, 3
        %v756 = vmul.f32 %v693, %v754
        %v757 = vmul.f32 %v693, %v755
        %v758 = vmul.f32 %v698, %v754
        %v759 = vmul.f32 %v698, %v755
        %v760 = vmul.f32 %v703, %v754
        %v761 = vmul.f32 %v703, %v755
        %v762 = vmul.f32 %v708, %v754
        %v763 = vmul.f32 %v708, %v755
        %v764 = vmul.f32 %v713, %v754
        %v765 = vmul.f32 %v713, %v755
        %v766 = vmul.f32 %v718, %v754
        %v767 = vmul.f32 %v718, %v755
        %v768 = vmul.f32 %v723, %v754
        %v769 = vmul.f32 %v723, %v755
        %v770 = vmul.f32 %v728, %v754
        %v771 = vmul.f32 %v728, %v755
        %v772 = vmul.f32 %v733, %v754
        %v773 = vmul.f32 %v733, %v755
        %v774 = vmul.f32 %v738, %v754
        %v775 = vmul.f32 %v738, %v755
        %v776 = vmul.f32 %v743, %v754
        %v777 = vmul.f32 %v743, %v755
        %v778 = vmul.f32 %v748, %v754
        %v779 = vmul.f32 %v748, %v755
        %v780 = vadd.f32 %v666, %v756
        %v781 = vadd.f32 %v667, %v757
        %v782 = vadd.f32 %v668, %v758
        %v783 = vadd.f32 %v669, %v759
        %v784 = vadd.f32 %v670, %v760
        %v785 = vadd.f32 %v671, %v761
        %v786 = vadd.f32 %v672, %v762
        %v787 = vadd.f32 %v673, %v763
        %v788 = vadd.f32 %v674, %v764
        %v789 = vadd.f32 %v675, %v765
        %v790 = vadd.f32 %v676, %v766
        %v791 = vadd.f32 %v677, %v767
        %v792 = vadd.f32 %v678, %v768
        %v793 = vadd.f32 %v679, %v769
        %v794 = vadd.f32 %v680, %v770
        %v795 = vadd.f32 %v681, %v771
        %v796 = vadd.f32 %v682, %v772
        %v797 = vadd.f32 %v683, %v773
        %v798 = vadd.f32 %v684, %v774
        %v799 = vadd.f32 %v685, %v775
        %v800 = vadd.f32 %v686, %v776
        %v801 = vadd.f32 %v687, %v777
        %v802 = vadd.f32 %v688, %v778
        %v803 = vadd.f32 %v689, %v779
        %v804 = vld [vmem:[%s272] sm:$0xff]
        %v805 = vld [vmem:[%s272 + $0x8] sm:$0xff]
        %v806 = vld [vmem:[%s272 + $0x10] sm:$0xff]
        %v807 = vld [vmem:[%s272 + $0x18] sm:$0xff]
        %v808 = vld [vmem:[%s272 + $0x20] sm:$0xff]
        %v809 = vld [vmem:[%s272 + $0x28] sm:$0xff]
        %v810 = vld [vmem:[%s272 + $0x30] sm:$0xff]
        %v811 = vld [vmem:[%s272 + $0x38] sm:$0xff]
        %v812 = vld [vmem:[%s272 + $0x40] sm:$0xff]
        %v813 = vld [vmem:[%s272 + $0x48] sm:$0xff]
        %v814 = vld [vmem:[%s272 + $0x50] sm:$0xff]
        %v815 = vld [vmem:[%s272 + $0x58] sm:$0xff]
        %817 = vset.pattern.permute.xlu0 0
        %818 = vperm.xlu0 %817, %v804
        %v819 = vpop.permute.xlu0 %818
        %822 = vset.pattern.permute.xlu0 0
        %823 = vperm.xlu0 %822, %v805
        %v824 = vpop.permute.xlu0 %823
        %827 = vset.pattern.permute.xlu0 0
        %828 = vperm.xlu0 %827, %v806
        %v829 = vpop.permute.xlu0 %828
        %832 = vset.pattern.permute.xlu0 0
        %833 = vperm.xlu0 %832, %v807
        %v834 = vpop.permute.xlu0 %833
        %837 = vset.pattern.permute.xlu0 0
        %838 = vperm.xlu0 %837, %v808
        %v839 = vpop.permute.xlu0 %838
        %842 = vset.pattern.permute.xlu0 0
        %843 = vperm.xlu0 %842, %v809
        %v844 = vpop.permute.xlu0 %843
        %847 = vset.pattern.permute.xlu0 0
        %848 = vperm.xlu0 %847, %v810
        %v849 = vpop.permute.xlu0 %848
        %852 = vset.pattern.permute.xlu0 0
        %853 = vperm.xlu0 %852, %v811
        %v854 = vpop.permute.xlu0 %853
        %857 = vset.pattern.permute.xlu0 0
        %858 = vperm.xlu0 %857, %v812
        %v859 = vpop.permute.xlu0 %858
        %862 = vset.pattern.permute.xlu0 0
        %863 = vperm.xlu0 %862, %v813
        %v864 = vpop.permute.xlu0 %863
        %867 = vset.pattern.permute.xlu0 0
        %868 = vperm.xlu0 %867, %v814
        %v869 = vpop.permute.xlu0 %868
        %872 = vset.pattern.permute.xlu0 0
        %873 = vperm.xlu0 %872, %v815
        %v874 = vpop.permute.xlu0 %873
        %v876 = vadd.f32 %v780, %v819
        %v877 = vadd.f32 %v781, %v819
        %v878 = vadd.f32 %v782, %v824
        %v879 = vadd.f32 %v783, %v824
        %v880 = vadd.f32 %v784, %v829
        %v881 = vadd.f32 %v785, %v829
        %v882 = vadd.f32 %v786, %v834
        %v883 = vadd.f32 %v787, %v834
        %v884 = vadd.f32 %v788, %v839
        %v885 = vadd.f32 %v789, %v839
        %v886 = vadd.f32 %v790, %v844
        %v887 = vadd.f32 %v791, %v844
        %v888 = vadd.f32 %v792, %v849
        %v889 = vadd.f32 %v793, %v849
        %v890 = vadd.f32 %v794, %v854
        %v891 = vadd.f32 %v795, %v854
        %v892 = vadd.f32 %v796, %v859
        %v893 = vadd.f32 %v797, %v859
        %v894 = vadd.f32 %v798, %v864
        %v895 = vadd.f32 %v799, %v864
        %v896 = vadd.f32 %v800, %v869
        %v897 = vadd.f32 %v801, %v869
        %v898 = vadd.f32 %v802, %v874
        %v899 = vadd.f32 %v803, %v874
        %v900 = vmax.f32 %v876, 0.0
        %v901 = vmax.f32 %v877, 0.0
        %v902 = vmax.f32 %v878, 0.0
        %v903 = vmax.f32 %v879, 0.0
        %v904 = vmax.f32 %v880, 0.0
        %v905 = vmax.f32 %v881, 0.0
        %v906 = vmax.f32 %v882, 0.0
        %v907 = vmax.f32 %v883, 0.0
        %v908 = vmax.f32 %v884, 0.0
        %v909 = vmax.f32 %v885, 0.0
        %v910 = vmax.f32 %v886, 0.0
        %v911 = vmax.f32 %v887, 0.0
        %v912 = vmax.f32 %v888, 0.0
        %v913 = vmax.f32 %v889, 0.0
        %v914 = vmax.f32 %v890, 0.0
        %v915 = vmax.f32 %v891, 0.0
        %v916 = vmax.f32 %v892, 0.0
        %v917 = vmax.f32 %v893, 0.0
        %v918 = vmax.f32 %v894, 0.0
        %v919 = vmax.f32 %v895, 0.0
        %v920 = vmax.f32 %v896, 0.0
        %v921 = vmax.f32 %v897, 0.0
        %v922 = vmax.f32 %v898, 0.0
        %v923 = vmax.f32 %v899, 0.0
        %925 = vset.pattern.permute.xlu0 0
        %926 = vperm.xlu0 %925, %v323
        %v927 = vpop.permute.xlu0 %926
        %930 = vset.pattern.permute.xlu0 0
        %931 = vperm.xlu0 %930, %v324
        %v932 = vpop.permute.xlu0 %931
        %935 = vset.pattern.permute.xlu0 0
        %936 = vperm.xlu0 %935, %v325
        %v937 = vpop.permute.xlu0 %936
        %940 = vset.pattern.permute.xlu0 0
        %941 = vperm.xlu0 %940, %v326
        %v942 = vpop.permute.xlu0 %941
        %945 = vset.pattern.permute.xlu0 0
        %946 = vperm.xlu0 %945, %v327
        %v947 = vpop.permute.xlu0 %946
        %950 = vset.pattern.permute.xlu0 0
        %951 = vperm.xlu0 %950, %v328
        %v952 = vpop.permute.xlu0 %951
        %955 = vset.pattern.permute.xlu0 0
        %956 = vperm.xlu0 %955, %v329
        %v957 = vpop.permute.xlu0 %956
        %960 = vset.pattern.permute.xlu0 0
        %961 = vperm.xlu0 %960, %v330
        %v962 = vpop.permute.xlu0 %961
        %965 = vset.pattern.permute.xlu0 0
        %966 = vperm.xlu0 %965, %v331
        %v967 = vpop.permute.xlu0 %966
        %970 = vset.pattern.permute.xlu0 0
        %971 = vperm.xlu0 %970, %v332
        %v972 = vpop.permute.xlu0 %971
        %975 = vset.pattern.permute.xlu0 0
        %976 = vperm.xlu0 %975, %v333
        %v977 = vpop.permute.xlu0 %976
        %980 = vset.pattern.permute.xlu0 0
        %981 = vperm.xlu0 %980, %v334
        %v982 = vpop.permute.xlu0 %981
        %v984 = vmul.f32 %v900, %v927
        %v985 = vmul.f32 %v901, %v927
        %v986 = vmul.f32 %v902, %v932
        %v987 = vmul.f32 %v903, %v932
        %v988 = vmul.f32 %v904, %v937
        %v989 = vmul.f32 %v905, %v937
        %v990 = vmul.f32 %v906, %v942
        %v991 = vmul.f32 %v907, %v942
        %v992 = vmul.f32 %v908, %v947
        %v993 = vmul.f32 %v909, %v947
        %v994 = vmul.f32 %v910, %v952
        %v995 = vmul.f32 %v911, %v952
        %v996 = vmul.f32 %v912, %v957
        %v997 = vmul.f32 %v913, %v957
        %v998 = vmul.f32 %v914, %v962
        %v999 = vmul.f32 %v915, %v962
        %v1000 = vmul.f32 %v916, %v967
        %v1001 = vmul.f32 %v917, %v967
        %v1002 = vmul.f32 %v918, %v972
        %v1003 = vmul.f32 %v919, %v972
        %v1004 = vmul.f32 %v920, %v977
        %v1005 = vmul.f32 %v921, %v977
        %v1006 = vmul.f32 %v922, %v982
        %v1007 = vmul.f32 %v923, %v982
        %v1008 = vadd.f32 %v984, %v986
        %v1009 = vadd.f32 %v1008, %v988
        %v1010 = vadd.f32 %v1009, %v990
        %v1011 = vadd.f32 %v1010, %v992
        %v1012 = vadd.f32 %v1011, %v994
        %v1013 = vadd.f32 %v1012, %v996
        %v1014 = vadd.f32 %v1013, %v998
        %v1015 = vadd.f32 %v1014, %v1000
        %v1016 = vadd.f32 %v1015, %v1002
        %v1017 = vadd.f32 %v1016, %v1004
        %v1018 = vadd.f32 %v1017, %v1006
        %v1019 = vrot.slane %v1018, 4
        %v1020 = vadd.f32 %v1018, %v1019
        %v1021 = vrot.slane %v1020, 2
        %v1022 = vadd.f32 %v1020, %v1021
        %v1023 = vrot.slane %v1022, 1
        %v1024 = vadd.f32 %v1022, %v1023
        %v1025 = vadd.f32 %v985, %v987
        %v1026 = vadd.f32 %v1025, %v989
        %v1027 = vadd.f32 %v1026, %v991
        %v1028 = vadd.f32 %v1027, %v993
        %v1029 = vadd.f32 %v1028, %v995
        %v1030 = vadd.f32 %v1029, %v997
        %v1031 = vadd.f32 %v1030, %v999
        %v1032 = vadd.f32 %v1031, %v1001
        %v1033 = vadd.f32 %v1032, %v1003
        %v1034 = vadd.f32 %v1033, %v1005
        %v1035 = vadd.f32 %v1034, %v1007
        %v1036 = vrot.slane %v1035, 4
        %v1037 = vadd.f32 %v1035, %v1036
        %v1038 = vrot.slane %v1037, 2
        %v1039 = vadd.f32 %v1037, %v1038
        %v1040 = vrot.slane %v1039, 1
        %v1041 = vadd.f32 %v1039, %v1040
        %1043 = vset.pattern.permute.xlu0 0
        %1044 = vperm.xlu0 %1043, %v335
        %v1045 = vpop.permute.xlu0 %1044
        %1048 = vset.pattern.permute.xlu0 0
        %1049 = vperm.xlu0 %1048, %v336
        %v1050 = vpop.permute.xlu0 %1049
        %1053 = vset.pattern.permute.xlu0 0
        %1054 = vperm.xlu0 %1053, %v337
        %v1055 = vpop.permute.xlu0 %1054
        %1058 = vset.pattern.permute.xlu0 0
        %1059 = vperm.xlu0 %1058, %v338
        %v1060 = vpop.permute.xlu0 %1059
        %1063 = vset.pattern.permute.xlu0 0
        %1064 = vperm.xlu0 %1063, %v339
        %v1065 = vpop.permute.xlu0 %1064
        %1068 = vset.pattern.permute.xlu0 0
        %1069 = vperm.xlu0 %1068, %v340
        %v1070 = vpop.permute.xlu0 %1069
        %1073 = vset.pattern.permute.xlu0 0
        %1074 = vperm.xlu0 %1073, %v341
        %v1075 = vpop.permute.xlu0 %1074
        %1078 = vset.pattern.permute.xlu0 0
        %1079 = vperm.xlu0 %1078, %v342
        %v1080 = vpop.permute.xlu0 %1079
        %1083 = vset.pattern.permute.xlu0 0
        %1084 = vperm.xlu0 %1083, %v343
        %v1085 = vpop.permute.xlu0 %1084
        %1088 = vset.pattern.permute.xlu0 0
        %1089 = vperm.xlu0 %1088, %v344
        %v1090 = vpop.permute.xlu0 %1089
        %1093 = vset.pattern.permute.xlu0 0
        %1094 = vperm.xlu0 %1093, %v345
        %v1095 = vpop.permute.xlu0 %1094
        %1098 = vset.pattern.permute.xlu0 0
        %1099 = vperm.xlu0 %1098, %v346
        %v1100 = vpop.permute.xlu0 %1099
        %v1102 = vmul.f32 %v900, %v1045
        %v1103 = vmul.f32 %v901, %v1045
        %v1104 = vmul.f32 %v902, %v1050
        %v1105 = vmul.f32 %v903, %v1050
        %v1106 = vmul.f32 %v904, %v1055
        %v1107 = vmul.f32 %v905, %v1055
        %v1108 = vmul.f32 %v906, %v1060
        %v1109 = vmul.f32 %v907, %v1060
        %v1110 = vmul.f32 %v908, %v1065
        %v1111 = vmul.f32 %v909, %v1065
        %v1112 = vmul.f32 %v910, %v1070
        %v1113 = vmul.f32 %v911, %v1070
        %v1114 = vmul.f32 %v912, %v1075
        %v1115 = vmul.f32 %v913, %v1075
        %v1116 = vmul.f32 %v914, %v1080
        %v1117 = vmul.f32 %v915, %v1080
        %v1118 = vmul.f32 %v916, %v1085
        %v1119 = vmul.f32 %v917, %v1085
        %v1120 = vmul.f32 %v918, %v1090
        %v1121 = vmul.f32 %v919, %v1090
        %v1122 = vmul.f32 %v920, %v1095
        %v1123 = vmul.f32 %v921, %v1095
        %v1124 = vmul.f32 %v922, %v1100
        %v1125 = vmul.f32 %v923, %v1100
        %v1126 = vadd.f32 %v1102, %v1104
        %v1127 = vadd.f32 %v1126, %v1106
        %v1128 = vadd.f32 %v1127, %v1108
        %v1129 = vadd.f32 %v1128, %v1110
        %v1130 = vadd.f32 %v1129, %v1112
        %v1131 = vadd.f32 %v1130, %v1114
        %v1132 = vadd.f32 %v1131, %v1116
        %v1133 = vadd.f32 %v1132, %v1118
        %v1134 = vadd.f32 %v1133, %v1120
        %v1135 = vadd.f32 %v1134, %v1122
        %v1136 = vadd.f32 %v1135, %v1124
        %v1137 = vrot.slane %v1136, 4
        %v1138 = vadd.f32 %v1136, %v1137
        %v1139 = vrot.slane %v1138, 2
        %v1140 = vadd.f32 %v1138, %v1139
        %v1141 = vrot.slane %v1140, 1
        %v1142 = vadd.f32 %v1140, %v1141
        %v1143 = vadd.f32 %v1103, %v1105
        %v1144 = vadd.f32 %v1143, %v1107
        %v1145 = vadd.f32 %v1144, %v1109
        %v1146 = vadd.f32 %v1145, %v1111
        %v1147 = vadd.f32 %v1146, %v1113
        %v1148 = vadd.f32 %v1147, %v1115
        %v1149 = vadd.f32 %v1148, %v1117
        %v1150 = vadd.f32 %v1149, %v1119
        %v1151 = vadd.f32 %v1150, %v1121
        %v1152 = vadd.f32 %v1151, %v1123
        %v1153 = vadd.f32 %v1152, %v1125
        %v1154 = vrot.slane %v1153, 4
        %v1155 = vadd.f32 %v1153, %v1154
        %v1156 = vrot.slane %v1155, 2
        %v1157 = vadd.f32 %v1155, %v1156
        %v1158 = vrot.slane %v1157, 1
        %v1159 = vadd.f32 %v1157, %v1158
        %1161 = vset.pattern.permute.xlu0 0
        %1162 = vperm.xlu0 %1161, %v347
        %v1163 = vpop.permute.xlu0 %1162
        %1166 = vset.pattern.permute.xlu0 0
        %1167 = vperm.xlu0 %1166, %v348
        %v1168 = vpop.permute.xlu0 %1167
        %1171 = vset.pattern.permute.xlu0 0
        %1172 = vperm.xlu0 %1171, %v349
        %v1173 = vpop.permute.xlu0 %1172
        %1176 = vset.pattern.permute.xlu0 0
        %1177 = vperm.xlu0 %1176, %v350
        %v1178 = vpop.permute.xlu0 %1177
        %1181 = vset.pattern.permute.xlu0 0
        %1182 = vperm.xlu0 %1181, %v351
        %v1183 = vpop.permute.xlu0 %1182
        %1186 = vset.pattern.permute.xlu0 0
        %1187 = vperm.xlu0 %1186, %v352
        %v1188 = vpop.permute.xlu0 %1187
        %1191 = vset.pattern.permute.xlu0 0
        %1192 = vperm.xlu0 %1191, %v353
        %v1193 = vpop.permute.xlu0 %1192
        %1196 = vset.pattern.permute.xlu0 0
        %1197 = vperm.xlu0 %1196, %v354
        %v1198 = vpop.permute.xlu0 %1197
        %1201 = vset.pattern.permute.xlu0 0
        %1202 = vperm.xlu0 %1201, %v355
        %v1203 = vpop.permute.xlu0 %1202
        %1206 = vset.pattern.permute.xlu0 0
        %1207 = vperm.xlu0 %1206, %v356
        %v1208 = vpop.permute.xlu0 %1207
        %1211 = vset.pattern.permute.xlu0 0
        %1212 = vperm.xlu0 %1211, %v357
        %v1213 = vpop.permute.xlu0 %1212
        %1216 = vset.pattern.permute.xlu0 0
        %1217 = vperm.xlu0 %1216, %v358
        %v1218 = vpop.permute.xlu0 %1217
        %v1220 = vmul.f32 %v900, %v1163
        %v1221 = vmul.f32 %v901, %v1163
        %v1222 = vmul.f32 %v902, %v1168
        %v1223 = vmul.f32 %v903, %v1168
        %v1224 = vmul.f32 %v904, %v1173
        %v1225 = vmul.f32 %v905, %v1173
        %v1226 = vmul.f32 %v906, %v1178
        %v1227 = vmul.f32 %v907, %v1178
        %v1228 = vmul.f32 %v908, %v1183
        %v1229 = vmul.f32 %v909, %v1183
        %v1230 = vmul.f32 %v910, %v1188
        %v1231 = vmul.f32 %v911, %v1188
        %v1232 = vmul.f32 %v912, %v1193
        %v1233 = vmul.f32 %v913, %v1193
        %v1234 = vmul.f32 %v914, %v1198
        %v1235 = vmul.f32 %v915, %v1198
        %v1236 = vmul.f32 %v916, %v1203
        %v1237 = vmul.f32 %v917, %v1203
        %v1238 = vmul.f32 %v918, %v1208
        %v1239 = vmul.f32 %v919, %v1208
        %v1240 = vmul.f32 %v920, %v1213
        %v1241 = vmul.f32 %v921, %v1213
        %v1242 = vmul.f32 %v922, %v1218
        %v1243 = vmul.f32 %v923, %v1218
        %v1244 = vadd.f32 %v1220, %v1222
        %v1245 = vadd.f32 %v1244, %v1224
        %v1246 = vadd.f32 %v1245, %v1226
        %v1247 = vadd.f32 %v1246, %v1228
        %v1248 = vadd.f32 %v1247, %v1230
        %v1249 = vadd.f32 %v1248, %v1232
        %v1250 = vadd.f32 %v1249, %v1234
        %v1251 = vadd.f32 %v1250, %v1236
        %v1252 = vadd.f32 %v1251, %v1238
        %v1253 = vadd.f32 %v1252, %v1240
        %v1254 = vadd.f32 %v1253, %v1242
        %v1255 = vrot.slane %v1254, 4
        %v1256 = vadd.f32 %v1254, %v1255
        %v1257 = vrot.slane %v1256, 2
        %v1258 = vadd.f32 %v1256, %v1257
        %v1259 = vrot.slane %v1258, 1
        %v1260 = vadd.f32 %v1258, %v1259
        %v1261 = vadd.f32 %v1221, %v1223
        %v1262 = vadd.f32 %v1261, %v1225
        %v1263 = vadd.f32 %v1262, %v1227
        %v1264 = vadd.f32 %v1263, %v1229
        %v1265 = vadd.f32 %v1264, %v1231
        %v1266 = vadd.f32 %v1265, %v1233
        %v1267 = vadd.f32 %v1266, %v1235
        %v1268 = vadd.f32 %v1267, %v1237
        %v1269 = vadd.f32 %v1268, %v1239
        %v1270 = vadd.f32 %v1269, %v1241
        %v1271 = vadd.f32 %v1270, %v1243
        %v1272 = vrot.slane %v1271, 4
        %v1273 = vadd.f32 %v1271, %v1272
        %v1274 = vrot.slane %v1273, 2
        %v1275 = vadd.f32 %v1273, %v1274
        %v1276 = vrot.slane %v1275, 1
        %v1277 = vadd.f32 %v1275, %v1276
        %1279 = vset.pattern.permute.xlu0 0
        %1280 = vperm.xlu0 %1279, %v359
        %v1281 = vpop.permute.xlu0 %1280
        %1284 = vset.pattern.permute.xlu0 0
        %1285 = vperm.xlu0 %1284, %v360
        %v1286 = vpop.permute.xlu0 %1285
        %1289 = vset.pattern.permute.xlu0 0
        %1290 = vperm.xlu0 %1289, %v361
        %v1291 = vpop.permute.xlu0 %1290
        %1294 = vset.pattern.permute.xlu0 0
        %1295 = vperm.xlu0 %1294, %v362
        %v1296 = vpop.permute.xlu0 %1295
        %1299 = vset.pattern.permute.xlu0 0
        %1300 = vperm.xlu0 %1299, %v363
        %v1301 = vpop.permute.xlu0 %1300
        %1304 = vset.pattern.permute.xlu0 0
        %1305 = vperm.xlu0 %1304, %v364
        %v1306 = vpop.permute.xlu0 %1305
        %1309 = vset.pattern.permute.xlu0 0
        %1310 = vperm.xlu0 %1309, %v365
        %v1311 = vpop.permute.xlu0 %1310
        %1314 = vset.pattern.permute.xlu0 0
        %1315 = vperm.xlu0 %1314, %v366
        %v1316 = vpop.permute.xlu0 %1315
        %1319 = vset.pattern.permute.xlu0 0
        %1320 = vperm.xlu0 %1319, %v367
        %v1321 = vpop.permute.xlu0 %1320
        %1324 = vset.pattern.permute.xlu0 0
        %1325 = vperm.xlu0 %1324, %v368
        %v1326 = vpop.permute.xlu0 %1325
        %1329 = vset.pattern.permute.xlu0 0
        %1330 = vperm.xlu0 %1329, %v369
        %v1331 = vpop.permute.xlu0 %1330
        %1334 = vset.pattern.permute.xlu0 0
        %1335 = vperm.xlu0 %1334, %v370
        %v1336 = vpop.permute.xlu0 %1335
        %v1338 = vmul.f32 %v900, %v1281
        %v1339 = vmul.f32 %v901, %v1281
        %v1340 = vmul.f32 %v902, %v1286
        %v1341 = vmul.f32 %v903, %v1286
        %v1342 = vmul.f32 %v904, %v1291
        %v1343 = vmul.f32 %v905, %v1291
        %v1344 = vmul.f32 %v906, %v1296
        %v1345 = vmul.f32 %v907, %v1296
        %v1346 = vmul.f32 %v908, %v1301
        %v1347 = vmul.f32 %v909, %v1301
        %v1348 = vmul.f32 %v910, %v1306
        %v1349 = vmul.f32 %v911, %v1306
        %v1350 = vmul.f32 %v912, %v1311
        %v1351 = vmul.f32 %v913, %v1311
        %v1352 = vmul.f32 %v914, %v1316
        %v1353 = vmul.f32 %v915, %v1316
        %v1354 = vmul.f32 %v916, %v1321
        %v1355 = vmul.f32 %v917, %v1321
        %v1356 = vmul.f32 %v918, %v1326
        %v1357 = vmul.f32 %v919, %v1326
        %v1358 = vmul.f32 %v920, %v1331
        %v1359 = vmul.f32 %v921, %v1331
        %v1360 = vmul.f32 %v922, %v1336
        %v1361 = vmul.f32 %v923, %v1336
        %v1362 = vadd.f32 %v1338, %v1340
        %v1363 = vadd.f32 %v1362, %v1342
        %v1364 = vadd.f32 %v1363, %v1344
        %v1365 = vadd.f32 %v1364, %v1346
        %v1366 = vadd.f32 %v1365, %v1348
        %v1367 = vadd.f32 %v1366, %v1350
        %v1368 = vadd.f32 %v1367, %v1352
        %v1369 = vadd.f32 %v1368, %v1354
        %v1370 = vadd.f32 %v1369, %v1356
        %v1371 = vadd.f32 %v1370, %v1358
        %v1372 = vadd.f32 %v1371, %v1360
        %v1373 = vrot.slane %v1372, 4
        %v1374 = vadd.f32 %v1372, %v1373
        %v1375 = vrot.slane %v1374, 2
        %v1376 = vadd.f32 %v1374, %v1375
        %v1377 = vrot.slane %v1376, 1
        %v1378 = vadd.f32 %v1376, %v1377
        %v1379 = vadd.f32 %v1339, %v1341
        %v1380 = vadd.f32 %v1379, %v1343
        %v1381 = vadd.f32 %v1380, %v1345
        %v1382 = vadd.f32 %v1381, %v1347
        %v1383 = vadd.f32 %v1382, %v1349
        %v1384 = vadd.f32 %v1383, %v1351
        %v1385 = vadd.f32 %v1384, %v1353
        %v1386 = vadd.f32 %v1385, %v1355
        %v1387 = vadd.f32 %v1386, %v1357
        %v1388 = vadd.f32 %v1387, %v1359
        %v1389 = vadd.f32 %v1388, %v1361
        %v1390 = vrot.slane %v1389, 4
        %v1391 = vadd.f32 %v1389, %v1390
        %v1392 = vrot.slane %v1391, 2
        %v1393 = vadd.f32 %v1391, %v1392
        %v1394 = vrot.slane %v1393, 1
        %v1395 = vadd.f32 %v1393, %v1394
        %vm1396 = vcmask 1040384
        %v1397 = vsel %vm1396, %v1024, %v1142
        %v1398 = vsel %vm1396, %v1041, %v1159
        %vm1399 = vcmask 1041408
        %v1400 = vsel %vm1399, %v1397, %v1260
        %v1401 = vsel %vm1399, %v1398, %v1277
        %vm1402 = vcmask 1042432
        %v1403 = vsel %vm1402, %v1400, %v1378
        %v1404 = vsel %vm1402, %v1401, %v1395
        %v1405 = vld [vmem:[%s4] sm:$0xf]
        %1407 = vset.pattern.permute.xlu0 0
        %1408 = vperm.xlu0 %1407, %v1405
        %v1409 = vpop.permute.xlu0 %1408
        %v1411 = vadd.f32 %v1403, %v1409
        %v1412 = vadd.f32 %v1404, %v1409
        %v1415 = vrot.slane %v1412, 4
        %vm1416 = vcmask 1043456
        %v1417 = vsel %vm1416, %v1411, %v1415
        %1419 = vst [vmem:[%s257] sm:$0xff] %v1417
        %s1420 = sand.u32 %s158, 1
        %s1421 = scalar_lea.sflag [#allocation3], %s1420
        %s1422 = sand.u32 %s158, 1
        %s1423 = smul.addr %s1422, 8
        %s1424 = scalar_lea.vmem [#allocation2], %s1423
        // Predicated region
        $region41: #{tpu_custom_call.1} parent=39 // pred_check
          %p1425 = pneg %p168
        $region42: #{tpu_custom_call.1} parent=39 // pred_check_branch
          %1427 = sbr.rel (%p1425) target = $region44
        $region43: #{tpu_custom_call.1} parent=39 // pred_region
          %s1428 = smul.u32 2, %s24
          %1430 = vsyncadd %s1421, 0
          %s1431 = smul.addr %s23, 2
          %s1432 = sadd.s32 %s1428, %s1431
          %s1433 = smul.addr %s1432, 4
          %s1434 = scalar_lea.hbm %s5, %s1433
          %s1436 = sshll.u32 %s1424, 4
          %s1437 = int_to_ptr.vmem [resolvable:$true] %s1436
          %s1438 = sshll.u32 %s1434, 4
          %s1439 = int_to_ptr.hbm [resolvable:$true] %s1438
          %1441 = dma.vmem_to_hbm [thread:$0]  %s1437, 128, %s1439, %s1421
        $region44: #{tpu_custom_call.1} parent=39 // pred_fallthru
          _
      $region40: #{tpu_custom_call.1} parent=5 // pred_fallthru
        _
      %p1442 = scmp.le.s32.totalorder 2, %s14
      // Predicated region
      $region45: #{tpu_custom_call.1} parent=5 // pred_check
        %p1443 = pneg %p1442
      $region46: #{tpu_custom_call.1} parent=5 // pred_check_branch
        %1445 = sbr.rel (%p1443) target = $region48
      $region47: #{tpu_custom_call.1} parent=5 // pred_region
        %s1446 = ssub.s32 %s14, 2
        // Predicated region
        $region49: #{tpu_custom_call.1} parent=47 // pred_check
          %p1447 = pneg %p174
        $region50: #{tpu_custom_call.1} parent=47 // pred_check_branch
          %1449 = sbr.rel (%p1447) target = $region52
        $region51: #{tpu_custom_call.1} parent=47 // pred_region
          %s1450 = sand.u32 %s159, 1
          %s1451 = scalar_lea.sflag [#allocation3], %s1450
          %s1452 = sand.u32 %s159, 1
          %s1453 = smul.addr %s1452, 8
          %s1454 = scalar_lea.vmem [#allocation2], %s1453
          %1456 = dma.done %s1451, 128
        $region52: #{tpu_custom_call.1} parent=47 // pred_fallthru
          _
      $region48: #{tpu_custom_call.1} parent=5 // pred_fallthru
        _
    $region6: #{tpu_custom_call.1} parent=1 // loop_footer
      %s18 = sadd.s32 1, %s14
    $region7: #{tpu_custom_call.1} parent=1 // loop_footer_branch
      %13 = sbr.rel target = $region3
    $region8: #{tpu_custom_call.1} parent=1 // loop_exit
      _
    %1457 = vsyncpa [#allocation3], 1
    %s1458 = scalar_lea.sflag [#allocation3], 1
    %1459 = vsyncpa %s1458, 1

</llo_original>
